<compile_context>
chip_gen: v5e
topology: v5e:2x2
jax: 0.10.0
libtpu: 0.0.40
codegen_flags: <defaults>
</compile_context>

<pallas_src>
import functools

import jax
import jax.numpy as jnp
from jax.experimental import pallas as pl
from jax.experimental.pallas import tpu as pltpu

LANES = 128
SUBLANES = 8
MIN_ROWS = 16                       # multiple of 16 keeps bf16's (16,128) min tile legal
KERNEL_MIN_NUMEL = 2048 * LANES     # below ~256K elements a fused XLA pass beats the
                                    # fixed pallas_call / pipeline overhead


def _pick_block_rows():
    """(block rows, vmem limit) per generation. 2048 rows = 1 MiB per f32 input per
    pipeline buffer (safe everywhere); 4096 rows halves per-step overhead on v6e/v7x
    and still fits their VMEM (128 / 64 MiB physical)."""
    try:
        kind = jax.devices()[0].device_kind.lower()
    except Exception:
        kind = ""
    if "v6" in kind or "v7" in kind:
        return 4096, 48 * 1024 * 1024
    return 2048, 32 * 1024 * 1024


def _masked_mse_kernel(state_ref, inp_ref, sum_out_ref, cnt_out_ref,
                       acc_ref, cnt_ref, *, block_rows, rows_in_last_block):
    i = pl.program_id(0)
    last = pl.num_programs(0) - 1

    # Scratch accumulators persist across the (sequential) grid; zero them once.
    @pl.when(i == 0)
    def _init():
        acc_ref[...] = jnp.zeros_like(acc_ref)
        cnt_ref[...] = jnp.zeros_like(cnt_ref)

    # Native-dtype loads; cast on the VPU instead of doubling HBM traffic.
    s = state_ref[...].astype(jnp.float32)
    x = inp_ref[...].astype(jnp.float32)
    finite = jnp.isfinite(x)

    def fold(valid):
        # nan_to_num(x) == x wherever x is finite, so masking the diff is sufficient.
        d = jnp.where(valid, s - x, 0.0)
        # Fold the (block_rows,128) tile onto an (8,128) vreg slab: pure VPU adds
        # (no XLU, no scalar RMW, no masked tiny store in the hot loop).
        sq = (d * d).reshape(block_rows // SUBLANES, SUBLANES, LANES).sum(axis=0)
        ct = valid.astype(jnp.int32).reshape(block_rows // SUBLANES, SUBLANES, LANES).sum(axis=0)
        acc_ref[...] += sq
        cnt_ref[...] += ct

    if rows_in_last_block == block_rows:
        # Every block is full: isfinite is the only mask anywhere (fast path).
        fold(finite)
    else:
        # Only the statically-partial last block pays for the row-index mask, which
        # rejects the unspecified contents of the out-of-range tail of its VMEM tile.
        @pl.when(i != last)
        def _full_blocks():
            fold(finite)

        @pl.when(i == last)
        def _partial_last_block():
            row = jax.lax.broadcasted_iota(jnp.int32, (block_rows, LANES), 0)
            fold(finite & (row < rows_in_last_block))

    # Single cross-lane reduce, once, on the last step; scalar results go to SMEM so
    # no separate XLA reduce op is needed after the kernel.
    @pl.when(i == last)
    def _finalize():
        sum_out_ref[0, 0] = jnp.sum(acc_ref[...])
        cnt_out_ref[0, 0] = jnp.sum(cnt_ref[...])


def _masked_mse_jnp(state, obs):
    """Fused single-pass fallback (small or non-lane-aligned inputs)."""
    finite = jnp.isfinite(obs)
    d = jnp.where(finite, state.astype(jnp.float32) - obs.astype(jnp.float32), 0.0)
    return jnp.sum(d * d), jnp.sum(finite.astype(jnp.int32))


def base_obs_cost(state, batch_input, w=1.0, *, min_kernel_numel=KERNEL_MIN_NUMEL):
    """w * mean((state - input)^2 over finite entries of `input`); any shape (e.g. NCHW)."""
    assert state.shape == batch_input.shape
    n = int(state.size)
    assert n < 2 ** 31, "in-kernel int32 row-index math assumes < 2**31 elements"

    # Small or non-128-aligned inputs: one fused XLA elementwise+reduce pass. No pad or
    # slice copies are ever emitted (the previous version's jnp.pad could ~3x HBM traffic).
    if n < max(min_kernel_numel, MIN_ROWS * LANES) or n % LANES != 0:
        sq, ct = _masked_mse_jnp(state, batch_input)
        return jnp.asarray(w, jnp.float32) * sq / ct.astype(jnp.float32)

    rows = n // LANES
    max_rows, vmem_limit = _pick_block_rows()
    block_rows = min(max_rows, (rows // MIN_ROWS) * MIN_ROWS)
    num_blocks = -(-rows // block_rows)
    rows_in_last_block = rows - (num_blocks - 1) * block_rows

    s2d = jnp.ravel(state).reshape(rows, LANES)         # contiguous reshape: no copy
    x2d = jnp.ravel(batch_input).reshape(rows, LANES)   # native dtype; cast in-kernel

    kernel = functools.partial(_masked_mse_kernel, block_rows=block_rows,
                               rows_in_last_block=rows_in_last_block)

    sq, ct = pl.pallas_call(
        kernel,
        out_shape=(
            jax.ShapeDtypeStruct((1, 1), jnp.float32),   # sum of squared masked diffs
            jax.ShapeDtypeStruct((1, 1), jnp.int32),     # exact finite-element count
        ),
        grid_spec=pltpu.PrefetchScalarGridSpec(
            num_scalar_prefetch=0,
            grid=(num_blocks,),
            in_specs=[
                pl.BlockSpec((block_rows, LANES), lambda i: (i, 0)),
                pl.BlockSpec((block_rows, LANES), lambda i: (i, 0)),
            ],
            out_specs=[
                pl.BlockSpec(memory_space=pltpu.MemorySpace.SMEM),
                pl.BlockSpec(memory_space=pltpu.MemorySpace.SMEM),
            ],
            scratch_shapes=[
                pltpu.VMEM((SUBLANES, LANES), jnp.float32),
                pltpu.VMEM((SUBLANES, LANES), jnp.int32),
            ],
        ),
        compiler_params=pltpu.CompilerParams(
            dimension_semantics=("arbitrary",),   # sequential reduction over blocks
            vmem_limit_bytes=vmem_limit,
        ),
    )(s2d, x2d)

    # cnt == 0 -> 0/0 -> NaN, matching PyTorch's mean over an empty selection.
    return jnp.asarray(w, jnp.float32) * (sq[0, 0] / ct[0, 0].astype(jnp.float32))


def _reference(state, obs, w):
    finite = jnp.isfinite(obs)
    diff = state.astype(jnp.float32) - jnp.nan_to_num(obs).astype(jnp.float32)
    sq = jnp.sum(jnp.where(finite, diff * diff, 0.0))
    return jnp.asarray(w, jnp.float32) * sq / jnp.sum(finite).astype(jnp.float32)


if __name__ == "__main__":
    key = jax.random.PRNGKey(0)

    def make_case(k, shape, p_drop=0.2):
        k1, k2, k3 = jax.random.split(k, 3)
        state = jax.random.normal(k1, shape, dtype=jnp.float32)
        obs = jax.random.normal(k2, shape, dtype=jnp.float32)
        drop = jax.random.bernoulli(k3, p=p_drop, shape=shape)
        obs = jnp.where(drop, jnp.nan, obs)
        obs = obs.at[(0,) * len(shape)].set(jnp.inf)   # exercise the inf branch of the mask
        return state, obs

    k0, k1, k2, k3 = jax.random.split(key, 4)

    # GradSolver-sized NCHW state (2,4,16,16): run the Pallas kernel (forced) and the
    # default fused-jnp small-input fast path; both must match the reference.
    state, obs = make_case(k0, (2, 4, 16, 16))
    loss_k = jax.block_until_ready(base_obs_cost(state, obs, w=1.0, min_kernel_numel=0))
    loss_f = jax.block_until_ready(base_obs_cost(state, obs, w=1.0))
    ref = _reference(state, obs, 1.0)
    assert jnp.allclose(loss_k, ref, rtol=1e-5, atol=1e-6), (loss_k, ref)
    assert jnp.allclose(loss_f, ref, rtol=1e-5, atol=1e-6), (loss_f, ref)

    # Non-lane-aligned numel: plain-jnp path (no pad / slice copies emitted).
    state, obs = make_case(k1, (2, 3, 10, 12))
    loss = jax.block_until_ready(base_obs_cost(state, obs, w=0.5))
    ref = _reference(state, obs, 0.5)
    assert jnp.allclose(loss, ref, rtol=1e-5, atol=1e-6), (loss, ref)

    # Multi-block kernel case with a partial last block (4608 rows): exercises the
    # accumulator across grid steps and the masked last-block branch.
    state, obs = make_case(k2, (3, 4, 192, 256), p_drop=0.3)
    loss = jax.block_until_ready(base_obs_cost(state, obs, w=2.0))
    ref = _reference(state, obs, 2.0)
    assert jnp.allclose(loss, ref, rtol=1e-4, atol=1e-6), (loss, ref)

    # Multi-block kernel case whose rows divide the block exactly: exercises the
    # mask-free static fast path end to end.
    state, obs = make_case(k3, (4, 4, 256, 256), p_drop=0.1)
    loss = jax.block_until_ready(base_obs_cost(state, obs, w=1.5))
    ref = _reference(state, obs, 1.5)
    assert jnp.allclose(loss, ref, rtol=1e-4, atol=1e-6), (loss, ref)

    print("KERNEL_OK")
</pallas_src>

<mosaic_0001>
module attributes {stable_mosaic.version = 11 : i64} {
  func.func @_masked_mse_kernel(%arg0: i32, %arg1: memref<16x128xf32, #tpu.memory_space<vmem>>, %arg2: memref<16x128xf32, #tpu.memory_space<vmem>>, %arg3: memref<1x1xf32, #tpu.memory_space<smem>>, %arg4: memref<1x1xi32, #tpu.memory_space<smem>>, %arg5: memref<8x128xf32, #tpu.memory_space<vmem>>, %arg6: memref<8x128xi32, #tpu.memory_space<vmem>>) attributes {dimension_semantics = [#tpu.dimension_semantics<arbitrary>], iteration_bounds = array<i64: 1>, scalar_prefetch = 0 : i64, scratch_operands = 2 : i64, tpu.core_type = #tpu.core_type<tc>, window_params = [{transform_indices = @transform_0, window_bounds = array<i64: 16, 128>}, {transform_indices = @transform_1, window_bounds = array<i64: 16, 128>}, {transform_indices = @transform_2, window_bounds = array<i64: 1, 1>}, {transform_indices = @transform_3, window_bounds = array<i64: 1, 1>}]} {
    %c0_i32 = arith.constant 0 : i32
    %0 = arith.cmpi eq, %arg0, %c0_i32 : i32
    %1 = arith.extui %0 : i1 to i32
    %c0_i32_0 = arith.constant 0 : i32
    %2 = arith.cmpi ne, %1, %c0_i32_0 : i32
    scf.if %2 {
      %cst_17 = arith.constant 0.000000e+00 : f32
      %25 = vector.broadcast %cst_17 : f32 to vector<8x128xf32>
      %c0_18 = arith.constant 0 : index
      %c0_19 = arith.constant 0 : index
      %26 = vector.load %arg5[%c0_18, %c0_19] : memref<8x128xf32, #tpu.memory_space<vmem>>, vector<8x128xf32>
      tpu.vector_store %arg5[%c0_18, %c0_19], %25 {strides = array<i32>} : memref<8x128xf32, #tpu.memory_space<vmem>>, vector<8x128xf32>,
      %c0_i32_20 = arith.constant 0 : i32
      %27 = vector.broadcast %c0_i32_20 : i32 to vector<8x128xi32>
      %c0_21 = arith.constant 0 : index
      %c0_22 = arith.constant 0 : index
      %28 = vector.load %arg6[%c0_21, %c0_22] : memref<8x128xi32, #tpu.memory_space<vmem>>, vector<8x128xi32>
      tpu.vector_store %arg6[%c0_21, %c0_22], %27 {strides = array<i32>} : memref<8x128xi32, #tpu.memory_space<vmem>>, vector<8x128xi32>,
    } else {
    }
    %c0 = arith.constant 0 : index
    %c0_1 = arith.constant 0 : index
    %3 = vector.load %arg1[%c0, %c0_1] : memref<16x128xf32, #tpu.memory_space<vmem>>, vector<16x128xf32>
    %c0_2 = arith.constant 0 : index
    %c0_3 = arith.constant 0 : index
    %4 = vector.load %arg2[%c0_2, %c0_3] : memref<16x128xf32, #tpu.memory_space<vmem>>, vector<16x128xf32>
    %5 = tpu.weird %4 : vector<16x128xf32> -> vector<16x128xi1>
    %cst = arith.constant dense<true> : vector<16x128xi1>
    %6 = arith.xori %5, %cst : vector<16x128xi1>
    %7 = arith.subf %3, %4 : vector<16x128xf32>
    %cst_4 = arith.constant 0.000000e+00 : f32
    %8 = vector.broadcast %cst_4 : f32 to vector<16x128xf32>
    %9 = arith.select %6, %7, %8 : vector<16x128xi1>, vector<16x128xf32>
    %10 = arith.mulf %9, %9 : vector<16x128xf32>
    %11 = vector.shape_cast %10 : vector<16x128xf32> to vector<2x8x128xf32>
    %cst_5 = arith.constant dense<0.000000e+00> : vector<8x128xf32>
    %12 = vector.multi_reduction <add>, %11, %cst_5 [0] : vector<2x8x128xf32> to vector<8x128xf32>
    %13 = arith.extui %6 : vector<16x128xi1> to vector<16x128xi32>
    %14 = vector.shape_cast %13 : vector<16x128xi32> to vector<2x8x128xi32>
    %cst_6 = arith.constant dense<0> : vector<8x128xi32>
    %15 = vector.multi_reduction <add>, %14, %cst_6 [0] : vector<2x8x128xi32> to vector<8x128xi32>
    %c0_7 = arith.constant 0 : index
    %c0_8 = arith.constant 0 : index
    %16 = vector.load %arg5[%c0_7, %c0_8] : memref<8x128xf32, #tpu.memory_space<vmem>>, vector<8x128xf32>
    %17 = arith.addf %16, %12 : vector<8x128xf32>
    %c0_9 = arith.constant 0 : index
    %c0_10 = arith.constant 0 : index
    %18 = vector.load %arg5[%c0_9, %c0_10] : memref<8x128xf32, #tpu.memory_space<vmem>>, vector<8x128xf32>
    tpu.vector_store %arg5[%c0_9, %c0_10], %17 {strides = array<i32>} : memref<8x128xf32, #tpu.memory_space<vmem>>, vector<8x128xf32>,
    %c0_11 = arith.constant 0 : index
    %c0_12 = arith.constant 0 : index
    %19 = vector.load %arg6[%c0_11, %c0_12] : memref<8x128xi32, #tpu.memory_space<vmem>>, vector<8x128xi32>
    %20 = arith.addi %19, %15 : vector<8x128xi32>
    %c0_13 = arith.constant 0 : index
    %c0_14 = arith.constant 0 : index
    %21 = vector.load %arg6[%c0_13, %c0_14] : memref<8x128xi32, #tpu.memory_space<vmem>>, vector<8x128xi32>
    tpu.vector_store %arg6[%c0_13, %c0_14], %20 {strides = array<i32>} : memref<8x128xi32, #tpu.memory_space<vmem>>, vector<8x128xi32>,
    %c0_i32_15 = arith.constant 0 : i32
    %22 = arith.cmpi eq, %arg0, %c0_i32_15 : i32
    %23 = arith.extui %22 : i1 to i32
    %c0_i32_16 = arith.constant 0 : i32
    %24 = arith.cmpi ne, %23, %c0_i32_16 : i32
    scf.if %24 {
      %c0_17 = arith.constant 0 : index
      %c0_18 = arith.constant 0 : index
      %25 = vector.load %arg5[%c0_17, %c0_18] : memref<8x128xf32, #tpu.memory_space<vmem>>, vector<8x128xf32>
      %26 = vector.shape_cast %25 : vector<8x128xf32> to vector<1x8x128xf32>
      %cst_19 = arith.constant dense<0.000000e+00> : vector<1xf32>
      %27 = vector.multi_reduction <add>, %26, %cst_19 [1, 2] : vector<1x8x128xf32> to vector<1xf32>
      %28 = vector.shape_cast %27 : vector<1xf32> to vector<1x1x1xf32>
      %29 = vector.extract %28[0, 0, 0] : f32 from vector<1x1x1xf32>
      %c0_20 = arith.constant 0 : index
      %c0_21 = arith.constant 0 : index
      %30 = memref.load %arg3[%c0_20, %c0_21] : memref<1x1xf32, #tpu.memory_space<smem>>
      memref.store %29, %arg3[%c0_20, %c0_21] : memref<1x1xf32, #tpu.memory_space<smem>>
      %c0_22 = arith.constant 0 : index
      %c0_23 = arith.constant 0 : index
      %31 = vector.load %arg6[%c0_22, %c0_23] : memref<8x128xi32, #tpu.memory_space<vmem>>, vector<8x128xi32>
      %32 = vector.shape_cast %31 : vector<8x128xi32> to vector<1x8x128xi32>
      %cst_24 = arith.constant dense<0> : vector<1xi32>
      %33 = vector.multi_reduction <add>, %32, %cst_24 [1, 2] : vector<1x8x128xi32> to vector<1xi32>
      %34 = vector.shape_cast %33 : vector<1xi32> to vector<1x1x1xi32>
      %35 = vector.extract %34[0, 0, 0] : i32 from vector<1x1x1xi32>
      %c0_25 = arith.constant 0 : index
      %c0_26 = arith.constant 0 : index
      %36 = memref.load %arg4[%c0_25, %c0_26] : memref<1x1xi32, #tpu.memory_space<smem>>
      memref.store %35, %arg4[%c0_25, %c0_26] : memref<1x1xi32, #tpu.memory_space<smem>>
    } else {
    }
    return
  }
  func.func @transform_0(%arg0: i32) -> (i32, i32) {
    %c0_i32 = arith.constant 0 : i32
    %c0_i32_0 = arith.constant 0 : i32
    return %arg0, %c0_i32 : i32, i32
  }
  func.func @transform_1(%arg0: i32) -> (i32, i32) {
    %c0_i32 = arith.constant 0 : i32
    %c0_i32_0 = arith.constant 0 : i32
    return %arg0, %c0_i32 : i32, i32
  }
  func.func @transform_2(%arg0: i32) -> (i32, i32) {
    %c0_i32 = arith.constant 0 : i32
    %c0_i32_0 = arith.constant 0 : i32
    %c0_i32_1 = arith.constant 0 : i32
    return %c0_i32, %c0_i32_0 : i32, i32
  }
  func.func @transform_3(%arg0: i32) -> (i32, i32) {
    %c0_i32 = arith.constant 0 : i32
    %c0_i32_0 = arith.constant 0 : i32
    %c0_i32_1 = arith.constant 0 : i32
    return %c0_i32, %c0_i32_0 : i32, i32
  }
}

</mosaic_0001>

<llo_original>
// kernel: tpu_custom_call.1
$region0: #{tpu_custom_call.1}
  #allocation0 [shape = 'u32[]', space=smem, size = 0x4, offset = 0x4, fixed_abs, tag = 'smem constant byte address 0x4 - core index']
  #allocation1 [shape = 'u32[72,128]{1,0:T(1,128)}', space=vmem, size = 0x9000, scoped, tag = 'internal scratch']
  #allocation2 [shape = 'f32[8,128]{1,0:T(8,128)}', space=vmem, size = 0x1000, scoped, tag = 'scratch operand']
  #allocation3 [shape = 's32[8,128]{1,0:T(8,128)}', space=vmem, size = 0x1000, scoped, tag = 'scratch operand']
  %s0 = inlined_call_operand.hbm [shape: f32[16,128], index: 0, kind: input, shape index: {}]
  %s1 = inlined_call_operand.hbm [shape: f32[16,128], index: 1, kind: input, shape index: {}]
  %s2 = inlined_call_operand.hbm [shape: f32[1,1], index: 2, kind: output, shape index: {0}]
  %s3 = inlined_call_operand.hbm [shape: s32[1,1], index: 3, kind: output, shape index: {1}]
  %4 = xla_tuple %s2, %s3
  %s5 = sld [smem:[#allocation0]]
  $region42: #{tpu_custom_call.1} parent=0
    _
  %s7 = ssub.s32 1, %s5
  %s8 = scalar_select 0, %s7, %s5
  $region1: #{tpu_custom_call.1} parent=0
    #allocation4 [shape = 'u8[8192]{0}', space=vmem, size = 0x2000, scoped, tag = 'input window, operand 0, single buffered']
    #allocation5 [shape = 's32[1]{0}', space=sflag, size = 0x4, scoped, tag = 'scoped memory for tpu_custom_call.1']
    #allocation6 [shape = 's32[1]{0}', space=sflag, size = 0x4, scoped, tag = 'scoped memory for tpu_custom_call.1']
    #allocation7 [shape = 'u8[8192]{0}', space=vmem, size = 0x2000, scoped, tag = 'input window, operand 1, single buffered']
    #allocation8 [shape = 's32[1]{0}', space=sflag, size = 0x4, scoped, tag = 'scoped memory for tpu_custom_call.1']
    #allocation9 [shape = 'u8[512]{0}', space=smem, size = 0x200, scoped, tag = 'output window, operand 0, single buffered']
    #allocation10 [shape = 'u8[512]{0}', space=smem, size = 0x200, scoped, tag = 'output window, operand 1, single buffered']
    #allocation11 [shape = 's32[1]{0}', space=sflag, size = 0x4, scoped, tag = 'scoped memory for tpu_custom_call.1']
    %9 = vsyncpa [#allocation5], 0
    %10 = vsyncpa [#allocation8], 0
    %11 = vsyncpa [#allocation6], 0
    %12 = vsyncpa [#allocation11], 0
    // Predicated region
    $region2: #{tpu_custom_call.1} parent=1 // pred_check
      _
    $region3: #{tpu_custom_call.1} parent=1 // pred_check_branch
      %14 = sbr.rel (0) target = $region5
    $region4: #{tpu_custom_call.1} parent=1 // pred_region
      %16 = vsyncadd [#allocation5], 0
      %s17 = sshll.u32 %s0, 4
      %s18 = int_to_ptr.hbm [resolvable:$true] %s17
      %s19 = sshll.u32 [#allocation4], 4
      %s20 = int_to_ptr.vmem [resolvable:$true] %s19
      %25 = dma.hbm_to_vmem [thread:$0]  %s18, 256, %s20, [#allocation5], 128, 128, 8
    $region5: #{tpu_custom_call.1} parent=1 // pred_fallthru
      _
    // Predicated region
    $region6: #{tpu_custom_call.1} parent=1 // pred_check
      _
    $region7: #{tpu_custom_call.1} parent=1 // pred_check_branch
      %27 = sbr.rel (0) target = $region9
    $region8: #{tpu_custom_call.1} parent=1 // pred_region
      %29 = vsyncadd [#allocation8], 0
      %s30 = sshll.u32 %s1, 4
      %s31 = int_to_ptr.hbm [resolvable:$true] %s30
      %s32 = sshll.u32 [#allocation7], 4
      %s33 = int_to_ptr.vmem [resolvable:$true] %s32
      %38 = dma.hbm_to_vmem [thread:$0]  %s31, 256, %s33, [#allocation8], 128, 128, 8
    $region9: #{tpu_custom_call.1} parent=1 // pred_fallthru
      _
    // Predicated region
    $region10: #{tpu_custom_call.1} parent=1 // pred_check
      _
    $region11: #{tpu_custom_call.1} parent=1 // pred_check_branch
      %40 = sbr.rel (0) target = $region13
    $region12: #{tpu_custom_call.1} parent=1 // pred_region
      %42 = dma.done [#allocation5], 256
    $region13: #{tpu_custom_call.1} parent=1 // pred_fallthru
      _
    // Predicated region
    $region14: #{tpu_custom_call.1} parent=1 // pred_check
      _
    $region15: #{tpu_custom_call.1} parent=1 // pred_check_branch
      %44 = sbr.rel (0) target = $region17
    $region16: #{tpu_custom_call.1} parent=1 // pred_region
      %46 = dma.done [#allocation8], 256
    $region17: #{tpu_custom_call.1} parent=1 // pred_fallthru
      _
    %p47 = scmp.eq.s32.totalorder 0, 0
    // Predicated region
    $region18: #{tpu_custom_call.1} parent=1 // pred_check
      %p48 = pneg %p47
    $region19: #{tpu_custom_call.1} parent=1 // pred_check_branch
      %50 = sbr.rel (%p48) target = $region21
    $region20: #{tpu_custom_call.1} parent=1 // pred_region
      %51 = vst [vmem:[#allocation2] sm:$0xff] 0.0
      %52 = vst [vmem:[#allocation3] sm:$0xff] 0
    $region21: #{tpu_custom_call.1} parent=1 // pred_fallthru
      _
    %v53 = vld [vmem:[#allocation4] sm:$0xff]
    %v54 = vld [vmem:[#allocation4 + $0x8] sm:$0xff]
    %v55 = vld [vmem:[#allocation7] sm:$0xff]
    %v56 = vld [vmem:[#allocation7 + $0x8] sm:$0xff]
    %vm57 = vweird.f32 %v55
    %vm58 = vweird.f32 %v56
    %vm59 = vmxor %vm57, 1
    %vm60 = vmxor %vm58, 1
    %v61 = vsub.f32 %v53, %v55
    %v62 = vsub.f32 %v54, %v56
    %v63 = vsel %vm59, %v61, 0.0
    %v64 = vsel %vm60, %v62, 0.0
    %v65 = vmul.f32 %v63, %v63
    %v66 = vmul.f32 %v64, %v64
    %v67 = vadd.f32 %v65, %v66
    %v68 = vsel %vm59, 1, 0
    %v69 = vsel %vm60, 1, 0
    %v70 = vadd.s32 %v68, %v69
    %v71 = vld [vmem:[#allocation2] sm:$0xff]
    %v72 = vadd.f32 %v71, %v67
    %73 = vst [vmem:[#allocation2] sm:$0xff] %v72
    %v74 = vld [vmem:[#allocation3] sm:$0xff]
    %v75 = vadd.s32 %v74, %v70
    %76 = vst [vmem:[#allocation3] sm:$0xff] %v75
    // Predicated region
    $region22: #{tpu_custom_call.1} parent=1 // pred_check
      %p77 = pneg %p47
    $region23: #{tpu_custom_call.1} parent=1 // pred_check_branch
      %79 = sbr.rel (%p77) target = $region25
    $region24: #{tpu_custom_call.1} parent=1 // pred_region
      %v80 = vld [vmem:[#allocation2] sm:$0xff]
      %81 = vadd.xlane.f32.xlu0 %v80
      %v82 = vpop.xlane.xlu0 %81
      %v83 = vrot.slane %v82, 4
      %v84 = vadd.f32 %v82, %v83
      %v85 = vrot.slane %v84, 2
      %v86 = vadd.f32 %v84, %v85
      %v87 = vrot.slane %v86, 1
      %v88 = vadd.f32 %v86, %v87
      %s89 = vtos %v88
      %s90 = scalar_lea.smem [#allocation9], 0
      %91 = sst [smem:[%s90]] %s89
      %v92 = vld [vmem:[#allocation3] sm:$0xff]
      %v93 = vand.u32 %v92, 65535
      %v94 = vshrl.u32 %v92, 16
      %v95 = vcvt.s32.f32 %v93
      %v96 = vcvt.s32.f32 %v94
      %97 = vadd.xlane.f32.xlu0 %v95
      %v98 = vpop.xlane.xlu0 %97
      %99 = vadd.xlane.f32.xlu0 %v96
      %v100 = vpop.xlane.xlu0 %99
      %v101 = vcvt.f32.s32 %v98
      %v102 = vcvt.f32.s32 %v100
      %v103 = vshll.u32 %v102, 16
      %v104 = vadd.s32 %v103, %v101
      %v105 = vrot.slane %v104, 4
      %v106 = vadd.s32 %v104, %v105
      %v107 = vrot.slane %v106, 2
      %v108 = vadd.s32 %v106, %v107
      %v109 = vrot.slane %v108, 1
      %v110 = vadd.s32 %v108, %v109
      %s111 = vtos %v110
      %s112 = scalar_lea.smem [#allocation10], 0
      %113 = sst [smem:[%s112]] %s111
    $region25: #{tpu_custom_call.1} parent=1 // pred_fallthru
      _
    // Predicated region
    $region26: #{tpu_custom_call.1} parent=1 // pred_check
      _
    $region27: #{tpu_custom_call.1} parent=1 // pred_check_branch
      %115 = sbr.rel (0) target = $region29
    $region28: #{tpu_custom_call.1} parent=1 // pred_region
      %117 = vsyncadd [#allocation6], 0
      %s119 = sshll.u32 %s2, 4
      %s120 = int_to_ptr.hbm [resolvable:$true] %s119
      %122 = dma.smem_to_hbm [#allocation9], 16, %s120, [#allocation6]
    $region29: #{tpu_custom_call.1} parent=1 // pred_fallthru
      _
    // Predicated region
    $region30: #{tpu_custom_call.1} parent=1 // pred_check
      _
    $region31: #{tpu_custom_call.1} parent=1 // pred_check_branch
      %124 = sbr.rel (0) target = $region33
    $region32: #{tpu_custom_call.1} parent=1 // pred_region
      %126 = vsyncadd [#allocation11], 0
      %s128 = sshll.u32 %s3, 4
      %s129 = int_to_ptr.hbm [resolvable:$true] %s128
      %131 = dma.smem_to_hbm [#allocation10], 16, %s129, [#allocation11]
    $region33: #{tpu_custom_call.1} parent=1 // pred_fallthru
      _
    // Predicated region
    $region34: #{tpu_custom_call.1} parent=1 // pred_check
      _
    $region35: #{tpu_custom_call.1} parent=1 // pred_check_branch
      %133 = sbr.rel (0) target = $region37
    $region36: #{tpu_custom_call.1} parent=1 // pred_region
      %135 = dma.done [#allocation6], 16
    $region37: #{tpu_custom_call.1} parent=1 // pred_fallthru
      _
    // Predicated region
    $region38: #{tpu_custom_call.1} parent=1 // pred_check
      _
    $region39: #{tpu_custom_call.1} parent=1 // pred_check_branch
      %137 = sbr.rel (0) target = $region41
    $region40: #{tpu_custom_call.1} parent=1 // pred_region
      %139 = dma.done [#allocation11], 16
    $region41: #{tpu_custom_call.1} parent=1 // pred_fallthru
      _
    %140 = sfence
    %141 = vsyncpa [#allocation5], 1
    %142 = vsyncpa [#allocation8], 1
    %143 = vsyncpa [#allocation6], 1
    %144 = vsyncpa [#allocation11], 1

</llo_original>
